<compile_context>
chip_gen: v5e
topology: v5e:2x2
jax: 0.10.0
libtpu: 0.0.40
codegen_flags: <defaults>
</compile_context>

<pallas_src>
import functools

import jax
import jax.numpy as jnp
from jax.experimental import pallas as pl
from jax.experimental.pallas import tpu as pltpu

LANE = 128  # projection dim is zero-padded to a multiple of the lane width


def _attention_kernel(x_ref, w_ref, b_ref, ctx_ref, out_ref):
    # x_ref:   [BT, S, D]  bf16  (batch tile, full sequence, full feature dim)
    # w_ref:   [D,  Pp]    bf16  (zero-padded projection weights; VMEM-resident)
    # b_ref:   [1,  Pp]    f32   (zero-padded bias)
    # ctx_ref: [1,  Pp]    f32   (zero-padded context vector)
    # out_ref: [BT, S]     f32   (softmax-over-sequence attention weights)
    bt = x_ref.shape[0]
    rows = []
    for i in range(bt):  # static unroll over the (small) batch tile — 2-D MXU ops only
        proj = jnp.dot(x_ref[i], w_ref[...], preferred_element_type=jnp.float32)  # [S, Pp]
        proj = jnp.tanh(proj + b_ref[...])                                         # f32
        # scores[s] = sum_p proj[s, p] * ctx[p], emitted lane-major as [1, S] so both
        # the softmax reductions and the final store stay lane-dense.
        rows.append(jax.lax.dot_general(
            ctx_ref[...], proj,
            dimension_numbers=(((1,), (1,)), ((), ())),
            preferred_element_type=jnp.float32))                                    # [1, S]

    scores = rows[0] if bt == 1 else jnp.concatenate(rows, axis=0)                  # [BT, S]

    # Softmax over the sequence (lane) axis, vectorized over the batch tile (sublanes).
    m = jnp.max(scores, axis=1, keepdims=True)
    e = jnp.exp(scores - m)
    denom = jnp.sum(e, axis=1, keepdims=True)
    out_ref[...] = (e * pl.reciprocal(denom, approx=True)).astype(out_ref.dtype)


def _pick_batch_tile(B, S, D, itemsize):
    """Biggest sensible batch tile: sublane-aligned, bounded unroll, ~4 MiB of x tiles."""
    if B <= 8:
        return B
    per_col = max(1, S * D * itemsize * 2)          # double-buffered input tile per column
    bt = (4 * 1024 * 1024) // per_col
    bt = max(8, min(16, (bt // 8) * 8))
    return bt


@functools.partial(jax.jit, static_argnames=("mxu_dtype",))
def task_specific_attention(x, w, b, ctx, *, mxu_dtype=jnp.bfloat16):
    """x: [S, B, D]; w: [D, P]; b: [1, P]; ctx: [1, 1, P] -> [S, B, 1] float32."""
    S, B, D = x.shape
    P = w.shape[1]
    p_pad = max(LANE, ((P + LANE - 1) // LANE) * LANE)
    itemsize = jnp.dtype(mxu_dtype).itemsize

    bt = _pick_batch_tile(B, S, D, itemsize)
    b_pad = ((B + bt - 1) // bt) * bt

    # ---- wrapper-side layout plumbing (free HBM layout work, kept out of the kernel) ----
    x_bt = jnp.transpose(x, (1, 0, 2)).astype(mxu_dtype)                     # [B, S, D]
    if b_pad != B:
        x_bt = jnp.pad(x_bt, ((0, b_pad - B), (0, 0), (0, 0)))               # [B_pad, S, D]
    w_p = jnp.zeros((D, p_pad), mxu_dtype).at[:, :P].set(w.astype(mxu_dtype))
    b_p = jnp.zeros((1, p_pad), jnp.float32).at[:, :P].set(b.astype(jnp.float32))
    c_p = jnp.zeros((1, p_pad), jnp.float32).at[:, :P].set(
        ctx.reshape(1, P).astype(jnp.float32))

    cost = pl.CostEstimate(
        flops=2 * S * b_pad * D * p_pad + 2 * S * b_pad * p_pad,
        transcendentals=S * b_pad * (p_pad + 1) + b_pad,
        bytes_accessed=(b_pad * S * D * itemsize + D * p_pad * itemsize
                        + 2 * p_pad * 4 + b_pad * S * 4),
    )

    out_bs = pl.pallas_call(
        _attention_kernel,
        out_shape=jax.ShapeDtypeStruct((b_pad, S), jnp.float32),
        grid=(b_pad // bt,),
        in_specs=[
            pl.BlockSpec((bt, S, D), lambda i: (i, 0, 0)),   # one batch tile per grid step
            pl.BlockSpec((D, p_pad), lambda i: (0, 0)),      # weights stay VMEM-resident
            pl.BlockSpec((1, p_pad), lambda i: (0, 0)),
            pl.BlockSpec((1, p_pad), lambda i: (0, 0)),
        ],
        out_specs=pl.BlockSpec((bt, S), lambda i: (i, 0)),   # lane-dense [bt, S] block
        compiler_params=pltpu.CompilerParams(
            dimension_semantics=("parallel",),               # megacore sharding on v7x
            vmem_limit_bytes=32 * 1024 * 1024,               # explicit; safe on all chips
        ),
        cost_estimate=cost,
    )(x_bt, w_p, b_p, c_p)

    # [B_pad, S] -> [S, B, 1]: wrapper-side slice/transpose/reshape, never inside the kernel.
    return jnp.transpose(out_bs[:B], (1, 0))[:, :, None]


def _reference(x, w, b, ctx, mxu_dtype=jnp.bfloat16):
    # Matches the kernel's MXU operand precision; accumulation and epilogue in f32.
    proj = jnp.einsum("sbd,dp->sbp", x.astype(mxu_dtype), w.astype(mxu_dtype),
                      preferred_element_type=jnp.float32)
    proj = jnp.tanh(proj + b[0].astype(jnp.float32))
    scores = jnp.sum(proj * ctx.astype(jnp.float32), axis=2, keepdims=True)
    return jax.nn.softmax(scores, axis=0)


if __name__ == "__main__":
    # Small shapes consistent with the module's forward contract.
    S, B, D, P = 8, 4, 32, 16  # seq_length, batch, input_size, projection_size

    key = jax.random.PRNGKey(0)
    kx, kw, kb, kc = jax.random.split(key, 4)

    x = jax.random.normal(kx, (S, B, D), dtype=jnp.float32)
    w = jax.random.normal(kw, (D, P), dtype=jnp.float32) * 0.1   # Linear weight (D x P)
    b = jax.random.normal(kb, (1, P), dtype=jnp.float32) * 0.1   # Linear bias
    ctx = jax.random.normal(kc, (1, 1, P), dtype=jnp.float32)    # context_vector parameter

    out = task_specific_attention(x, w, b, ctx)
    out = jax.block_until_ready(out)

    ref = _reference(x, w, b, ctx)
    assert out.shape == (S, B, 1)
    # Tolerance loosened vs. pure-f32: bf16 MXU operands + EUP approx reciprocal (~1e-3 rel).
    assert jnp.allclose(out, ref, atol=2e-3, rtol=2e-2), "mismatch vs. JAX reference"
    # Attention weights sum to ~1 over the sequence dim (approx-reciprocal wiggle).
    assert jnp.allclose(jnp.sum(out, axis=0), 1.0, atol=5e-3)

    print("KERNEL_OK")
</pallas_src>

<mosaic_0001>
module attributes {stable_mosaic.version = 11 : i64} {
  func.func @_attention_kernel(%arg0: i32, %arg1: memref<4x8x32xbf16, #tpu.memory_space<vmem>>, %arg2: memref<32x128xbf16, #tpu.memory_space<vmem>>, %arg3: memref<1x128xf32, #tpu.memory_space<vmem>>, %arg4: memref<1x128xf32, #tpu.memory_space<vmem>>, %arg5: memref<4x8xf32, #tpu.memory_space<vmem>>) attributes {dimension_semantics = [#tpu.dimension_semantics<parallel>], iteration_bounds = array<i64: 1>, scalar_prefetch = 0 : i64, scratch_operands = 0 : i64, tpu.core_type = #tpu.core_type<tc>, window_params = [{transform_indices = @transform_0, window_bounds = array<i64: 4, 8, 32>}, {pipeline_mode = #tpu.pipeline_mode<synchronous>, transform_indices = @transform_1, window_bounds = array<i64: 32, 128>}, {pipeline_mode = #tpu.pipeline_mode<synchronous>, transform_indices = @transform_2, window_bounds = array<i64: 1, 128>}, {pipeline_mode = #tpu.pipeline_mode<synchronous>, transform_indices = @transform_3, window_bounds = array<i64: 1, 128>}, {transform_indices = @transform_4, window_bounds = array<i64: 4, 8>}]} {
    %c0 = arith.constant 0 : index
    %c0_0 = arith.constant 0 : index
    %c0_1 = arith.constant 0 : index
    %0 = vector.load %arg1[%c0, %c0_0, %c0_1] : memref<4x8x32xbf16, #tpu.memory_space<vmem>>, vector<1x8x32xbf16>
    %1 = vector.shape_cast %0 : vector<1x8x32xbf16> to vector<8x32xbf16>
    %c0_2 = arith.constant 0 : index
    %c0_3 = arith.constant 0 : index
    %2 = vector.load %arg2[%c0_2, %c0_3] : memref<32x128xbf16, #tpu.memory_space<vmem>>, vector<32x128xbf16>
    %cst = arith.constant dense<0.000000e+00> : vector<8x128xf32>
    %3 = tpu.matmul %1, %2, %cst {dimension_numbers = #tpu.dot_dimension_numbers<[1], [0], [0], [1], [0, 0, 1, 1], [], []>} : vector<8x32xbf16>, vector<32x128xbf16>, vector<8x128xf32> -> vector<8x128xf32>
    %c0_4 = arith.constant 0 : index
    %c0_5 = arith.constant 0 : index
    %4 = vector.load %arg3[%c0_4, %c0_5] : memref<1x128xf32, #tpu.memory_space<vmem>>, vector<1x128xf32>
    %5 = vector.broadcast %4 : vector<1x128xf32> to vector<8x128xf32>
    %6 = arith.addf %3, %5 : vector<8x128xf32>
    %7 = math.tanh %6 : vector<8x128xf32>
    %c0_6 = arith.constant 0 : index
    %c0_7 = arith.constant 0 : index
    %8 = vector.load %arg4[%c0_6, %c0_7] : memref<1x128xf32, #tpu.memory_space<vmem>>, vector<1x128xf32>
    %cst_8 = arith.constant dense<0.000000e+00> : vector<1x8xf32>
    %9 = tpu.matmul %8, %7, %cst_8 {dimension_numbers = #tpu.dot_dimension_numbers<[1], [1], [0], [0], [0, 0, 1, 0], [], []>} : vector<1x128xf32>, vector<8x128xf32>, vector<1x8xf32> -> vector<1x8xf32>
    %c1 = arith.constant 1 : index
    %c0_9 = arith.constant 0 : index
    %c0_10 = arith.constant 0 : index
    %10 = vector.load %arg1[%c1, %c0_9, %c0_10] : memref<4x8x32xbf16, #tpu.memory_space<vmem>>, vector<1x8x32xbf16>
    %11 = vector.shape_cast %10 : vector<1x8x32xbf16> to vector<8x32xbf16>
    %c0_11 = arith.constant 0 : index
    %c0_12 = arith.constant 0 : index
    %12 = vector.load %arg2[%c0_11, %c0_12] : memref<32x128xbf16, #tpu.memory_space<vmem>>, vector<32x128xbf16>
    %cst_13 = arith.constant dense<0.000000e+00> : vector<8x128xf32>
    %13 = tpu.matmul %11, %12, %cst_13 {dimension_numbers = #tpu.dot_dimension_numbers<[1], [0], [0], [1], [0, 0, 1, 1], [], []>} : vector<8x32xbf16>, vector<32x128xbf16>, vector<8x128xf32> -> vector<8x128xf32>
    %c0_14 = arith.constant 0 : index
    %c0_15 = arith.constant 0 : index
    %14 = vector.load %arg3[%c0_14, %c0_15] : memref<1x128xf32, #tpu.memory_space<vmem>>, vector<1x128xf32>
    %15 = vector.broadcast %14 : vector<1x128xf32> to vector<8x128xf32>
    %16 = arith.addf %13, %15 : vector<8x128xf32>
    %17 = math.tanh %16 : vector<8x128xf32>
    %c0_16 = arith.constant 0 : index
    %c0_17 = arith.constant 0 : index
    %18 = vector.load %arg4[%c0_16, %c0_17] : memref<1x128xf32, #tpu.memory_space<vmem>>, vector<1x128xf32>
    %cst_18 = arith.constant dense<0.000000e+00> : vector<1x8xf32>
    %19 = tpu.matmul %18, %17, %cst_18 {dimension_numbers = #tpu.dot_dimension_numbers<[1], [1], [0], [0], [0, 0, 1, 0], [], []>} : vector<1x128xf32>, vector<8x128xf32>, vector<1x8xf32> -> vector<1x8xf32>
    %c2 = arith.constant 2 : index
    %c0_19 = arith.constant 0 : index
    %c0_20 = arith.constant 0 : index
    %20 = vector.load %arg1[%c2, %c0_19, %c0_20] : memref<4x8x32xbf16, #tpu.memory_space<vmem>>, vector<1x8x32xbf16>
    %21 = vector.shape_cast %20 : vector<1x8x32xbf16> to vector<8x32xbf16>
    %c0_21 = arith.constant 0 : index
    %c0_22 = arith.constant 0 : index
    %22 = vector.load %arg2[%c0_21, %c0_22] : memref<32x128xbf16, #tpu.memory_space<vmem>>, vector<32x128xbf16>
    %cst_23 = arith.constant dense<0.000000e+00> : vector<8x128xf32>
    %23 = tpu.matmul %21, %22, %cst_23 {dimension_numbers = #tpu.dot_dimension_numbers<[1], [0], [0], [1], [0, 0, 1, 1], [], []>} : vector<8x32xbf16>, vector<32x128xbf16>, vector<8x128xf32> -> vector<8x128xf32>
    %c0_24 = arith.constant 0 : index
    %c0_25 = arith.constant 0 : index
    %24 = vector.load %arg3[%c0_24, %c0_25] : memref<1x128xf32, #tpu.memory_space<vmem>>, vector<1x128xf32>
    %25 = vector.broadcast %24 : vector<1x128xf32> to vector<8x128xf32>
    %26 = arith.addf %23, %25 : vector<8x128xf32>
    %27 = math.tanh %26 : vector<8x128xf32>
    %c0_26 = arith.constant 0 : index
    %c0_27 = arith.constant 0 : index
    %28 = vector.load %arg4[%c0_26, %c0_27] : memref<1x128xf32, #tpu.memory_space<vmem>>, vector<1x128xf32>
    %cst_28 = arith.constant dense<0.000000e+00> : vector<1x8xf32>
    %29 = tpu.matmul %28, %27, %cst_28 {dimension_numbers = #tpu.dot_dimension_numbers<[1], [1], [0], [0], [0, 0, 1, 0], [], []>} : vector<1x128xf32>, vector<8x128xf32>, vector<1x8xf32> -> vector<1x8xf32>
    %c3 = arith.constant 3 : index
    %c0_29 = arith.constant 0 : index
    %c0_30 = arith.constant 0 : index
    %30 = vector.load %arg1[%c3, %c0_29, %c0_30] : memref<4x8x32xbf16, #tpu.memory_space<vmem>>, vector<1x8x32xbf16>
    %31 = vector.shape_cast %30 : vector<1x8x32xbf16> to vector<8x32xbf16>
    %c0_31 = arith.constant 0 : index
    %c0_32 = arith.constant 0 : index
    %32 = vector.load %arg2[%c0_31, %c0_32] : memref<32x128xbf16, #tpu.memory_space<vmem>>, vector<32x128xbf16>
    %cst_33 = arith.constant dense<0.000000e+00> : vector<8x128xf32>
    %33 = tpu.matmul %31, %32, %cst_33 {dimension_numbers = #tpu.dot_dimension_numbers<[1], [0], [0], [1], [0, 0, 1, 1], [], []>} : vector<8x32xbf16>, vector<32x128xbf16>, vector<8x128xf32> -> vector<8x128xf32>
    %c0_34 = arith.constant 0 : index
    %c0_35 = arith.constant 0 : index
    %34 = vector.load %arg3[%c0_34, %c0_35] : memref<1x128xf32, #tpu.memory_space<vmem>>, vector<1x128xf32>
    %35 = vector.broadcast %34 : vector<1x128xf32> to vector<8x128xf32>
    %36 = arith.addf %33, %35 : vector<8x128xf32>
    %37 = math.tanh %36 : vector<8x128xf32>
    %c0_36 = arith.constant 0 : index
    %c0_37 = arith.constant 0 : index
    %38 = vector.load %arg4[%c0_36, %c0_37] : memref<1x128xf32, #tpu.memory_space<vmem>>, vector<1x128xf32>
    %cst_38 = arith.constant dense<0.000000e+00> : vector<1x8xf32>
    %39 = tpu.matmul %38, %37, %cst_38 {dimension_numbers = #tpu.dot_dimension_numbers<[1], [1], [0], [0], [0, 0, 1, 0], [], []>} : vector<1x128xf32>, vector<8x128xf32>, vector<1x8xf32> -> vector<1x8xf32>
    %40 = tpu.concatenate %9, %19, %29, %39 in 0 : vector<1x8xf32>, vector<1x8xf32>, vector<1x8xf32>, vector<1x8xf32> -> vector<4x8xf32>
    %cst_39 = arith.constant dense<0xFF800000> : vector<4xf32>
    %41 = vector.multi_reduction <maximumf>, %40, %cst_39 [1] : vector<4x8xf32> to vector<4xf32>
    %42 = vector.shape_cast %41 : vector<4xf32> to vector<4x1xf32>
    %43 = vector.broadcast %42 : vector<4x1xf32> to vector<4x8xf32>
    %44 = arith.subf %40, %43 : vector<4x8xf32>
    %45 = math.exp %44 : vector<4x8xf32>
    %cst_40 = arith.constant dense<0.000000e+00> : vector<4xf32>
    %46 = vector.multi_reduction <add>, %45, %cst_40 [1] : vector<4x8xf32> to vector<4xf32>
    %47 = vector.shape_cast %46 : vector<4xf32> to vector<4x1xf32>
    %48 = tpu.reciprocal %47 {approx = true} : vector<4x1xf32> -> vector<4x1xf32>
    %49 = vector.broadcast %48 : vector<4x1xf32> to vector<4x8xf32>
    %50 = arith.mulf %45, %49 : vector<4x8xf32>
    %c0_41 = arith.constant 0 : index
    %c0_42 = arith.constant 0 : index
    %51 = vector.load %arg5[%c0_41, %c0_42] : memref<4x8xf32, #tpu.memory_space<vmem>>, vector<4x8xf32>
    tpu.vector_store %arg5[%c0_41, %c0_42], %50 {strides = array<i32>} : memref<4x8xf32, #tpu.memory_space<vmem>>, vector<4x8xf32>,
    return
  }
  func.func @transform_0(%arg0: i32) -> (i32, i32, i32) {
    %c0_i32 = arith.constant 0 : i32
    %c0_i32_0 = arith.constant 0 : i32
    %c0_i32_1 = arith.constant 0 : i32
    return %arg0, %c0_i32, %c0_i32_0 : i32, i32, i32
  }
  func.func @transform_1(%arg0: i32) -> (i32, i32) {
    %c0_i32 = arith.constant 0 : i32
    %c0_i32_0 = arith.constant 0 : i32
    %c0_i32_1 = arith.constant 0 : i32
    return %c0_i32, %c0_i32_0 : i32, i32
  }
  func.func @transform_2(%arg0: i32) -> (i32, i32) {
    %c0_i32 = arith.constant 0 : i32
    %c0_i32_0 = arith.constant 0 : i32
    %c0_i32_1 = arith.constant 0 : i32
    return %c0_i32, %c0_i32_0 : i32, i32
  }
  func.func @transform_3(%arg0: i32) -> (i32, i32) {
    %c0_i32 = arith.constant 0 : i32
    %c0_i32_0 = arith.constant 0 : i32
    %c0_i32_1 = arith.constant 0 : i32
    return %c0_i32, %c0_i32_0 : i32, i32
  }
  func.func @transform_4(%arg0: i32) -> (i32, i32) {
    %c0_i32 = arith.constant 0 : i32
    %c0_i32_0 = arith.constant 0 : i32
    return %arg0, %c0_i32 : i32, i32
  }
}

</mosaic_0001>

<llo_original>
// kernel: task_specific_attention.1
$region0: #{task_specific_attention.1}
  #allocation0 [shape = 'u32[]', space=smem, size = 0x4, offset = 0x4, fixed_abs, tag = 'smem constant byte address 0x4 - core index']
  #allocation1 [shape = 'u32[72,128]{1,0:T(1,128)}', space=vmem, size = 0x9000, scoped, tag = 'internal scratch']
  %s0 = inlined_call_operand.vmem [shape: bf16[4,8,32], index: 0, kind: input, shape index: {}]
  %s1 = inlined_call_operand.vmem [shape: bf16[32,128], index: 1, kind: input, shape index: {}]
  %s2 = inlined_call_operand.vmem [shape: f32[1,128], index: 2, kind: input, shape index: {}]
  %s3 = inlined_call_operand.vmem [shape: f32[1,128], index: 3, kind: input, shape index: {}]
  %s4 = inlined_call_operand.hbm [shape: f32[4,8], index: 4, kind: output, shape index: {}]
  %s5 = sld [smem:[#allocation0]]
  $region26: #{task_specific_attention.1} parent=0
    _
  %s7 = ssub.s32 1, %s5
  %s8 = scalar_select 0, %s7, %s5
  $region1: #{task_specific_attention.1} parent=0
    #allocation2 [shape = 'u8[2048]{0}', space=vmem, size = 0x800, scoped, tag = 'output window, operand 0, single buffered']
    #allocation3 [shape = 's32[1]{0}', space=sflag, size = 0x4, scoped, tag = 'scoped memory for task_specific_attention.1']
    %9 = vsyncpa [#allocation3], 0
    // Predicated region
    $region2: #{task_specific_attention.1} parent=1 // pred_check
      _
    $region3: #{task_specific_attention.1} parent=1 // pred_check_branch
      %11 = sbr.rel (0) target = $region5
    $region4: #{task_specific_attention.1} parent=1 // pred_region
      _
    $region5: #{task_specific_attention.1} parent=1 // pred_fallthru
      _
    // Predicated region
    $region6: #{task_specific_attention.1} parent=1 // pred_check
      _
    $region7: #{task_specific_attention.1} parent=1 // pred_check_branch
      %13 = sbr.rel (0) target = $region9
    $region8: #{task_specific_attention.1} parent=1 // pred_region
      _
    $region9: #{task_specific_attention.1} parent=1 // pred_fallthru
      _
    // Predicated region
    $region10: #{task_specific_attention.1} parent=1 // pred_check
      _
    $region11: #{task_specific_attention.1} parent=1 // pred_check_branch
      %15 = sbr.rel (0) target = $region13
    $region12: #{task_specific_attention.1} parent=1 // pred_region
      _
    $region13: #{task_specific_attention.1} parent=1 // pred_fallthru
      _
    // Predicated region
    $region14: #{task_specific_attention.1} parent=1 // pred_check
      _
    $region15: #{task_specific_attention.1} parent=1 // pred_check_branch
      %17 = sbr.rel (0) target = $region17
    $region16: #{task_specific_attention.1} parent=1 // pred_region
      _
    $region17: #{task_specific_attention.1} parent=1 // pred_fallthru
      _
    %v19 = vld [vmem:[%s0] sm:$0xf]
    %v20 = vld [vmem:[%s1] sm:$0xf]
    %v21 = vld [vmem:[%s1 + $0x4] sm:$0xf]
    %v22 = vld [vmem:[%s1 + $0x8] sm:$0xf]
    %v23 = vld [vmem:[%s1 + $0xc] sm:$0xf]
    %v24 = vld [vmem:[%s2] sm:$0x1]
    %v26 = vperm.slane %v24, 0
    %v32 = vunpack.c.l.b16 %v20
    %v33 = vunpack.c.l.b16 %v21
    %v34 = vunpack.c.l.b16 %v22
    %v35 = vunpack.c.l.b16 %v23
    %v36 = vpack.c.b16 %v33, %v32
    %v37 = vpack.c.b16 %v35, %v34
    %vm40 = vcmask 261120
    %v42 = vsel %vm40, %v19, 0
    %44 = vmatpush.bf16.msra.mxu0 0
    %45 = vmatpush.bf16.msra.mxu0 0
    %46 = vmatpush.bf16.msra.mxu0 0
    %47 = vmatpush.bf16.msra.mxu0 0
    %48 = vmatpush.bf16.msra.mxu0 0
    %49 = vmatpush.bf16.msra.mxu0 0
    %50 = vmatpush.bf16.msra.mxu0 %v37
    %51 = vmatpush.bf16.msra.mxu0 %v36
    %52 = vmatmul.bf16.gmra.mxu0 %v42
    %v53 = vpop.f32.mrf.mxu0
    %v54 = vadd.f32 %v26, %v53
    %v55 = vpop.f32.mrf.mxu0
    %56 = vdwg.mxu0
    %v57 = vtanh.pop %v54
    %v58 = vld [vmem:[%s3] sm:$0x1]
    %59 = vmatpush.xpose.msra.mxu0 0.0
    %60 = vmatpush.xpose.msra.mxu0 0.0
    %61 = vmatpush.xpose.msra.mxu0 0.0
    %62 = vmatpush.xpose.msra.mxu0 0.0
    %63 = vmatpush.xpose.msra.mxu0 0.0
    %64 = vmatpush.xpose.msra.mxu0 0.0
    %65 = vmatpush.xpose.msra.mxu0 0.0
    %66 = vmatpush.xpose.msra.mxu0 0.0
    %67 = vmatpush.xpose.msra.mxu0 0.0
    %68 = vmatpush.xpose.msra.mxu0 0.0
    %69 = vmatpush.xpose.msra.mxu0 0.0
    %70 = vmatpush.xpose.msra.mxu0 0.0
    %71 = vmatpush.xpose.msra.mxu0 0.0
    %72 = vmatpush.xpose.msra.mxu0 0.0
    %73 = vmatpush.xpose.msra.mxu0 0.0
    %74 = vmatpush.xpose.msra.mxu0 %v57
    %75 = vmatmul.f32.gmra.mxu0 %v58
    %v76 = vpop.f32.mrf.mxu0
    %v77 = vadd.f32 0.0, %v76
    %78 = vdwg.mxu0
    %s79 = scalar_lea.vmem %s0, 4
    %v80 = vld [vmem:[%s79] sm:$0xf]
    %v82 = vsel %vm40, %v80, 0
    %84 = vmatpush.bf16.msra.mxu0 0
    %85 = vmatpush.bf16.msra.mxu0 0
    %86 = vmatpush.bf16.msra.mxu0 0
    %87 = vmatpush.bf16.msra.mxu0 0
    %88 = vmatpush.bf16.msra.mxu0 0
    %89 = vmatpush.bf16.msra.mxu0 0
    %90 = vmatpush.bf16.msra.mxu0 %v37
    %91 = vmatpush.bf16.msra.mxu0 %v36
    %92 = vmatmul.bf16.gmra.mxu0 %v82
    %v93 = vpop.f32.mrf.mxu0
    %v94 = vadd.f32 %v26, %v93
    %v95 = vpop.f32.mrf.mxu0
    %96 = vdwg.mxu0
    %v97 = vtanh.pop %v94
    %98 = vmatpush.xpose.msra.mxu0 0.0
    %99 = vmatpush.xpose.msra.mxu0 0.0
    %100 = vmatpush.xpose.msra.mxu0 0.0
    %101 = vmatpush.xpose.msra.mxu0 0.0
    %102 = vmatpush.xpose.msra.mxu0 0.0
    %103 = vmatpush.xpose.msra.mxu0 0.0
    %104 = vmatpush.xpose.msra.mxu0 0.0
    %105 = vmatpush.xpose.msra.mxu0 0.0
    %106 = vmatpush.xpose.msra.mxu0 0.0
    %107 = vmatpush.xpose.msra.mxu0 0.0
    %108 = vmatpush.xpose.msra.mxu0 0.0
    %109 = vmatpush.xpose.msra.mxu0 0.0
    %110 = vmatpush.xpose.msra.mxu0 0.0
    %111 = vmatpush.xpose.msra.mxu0 0.0
    %112 = vmatpush.xpose.msra.mxu0 0.0
    %113 = vmatpush.xpose.msra.mxu0 %v97
    %114 = vmatmul.f32.gmra.mxu0 %v58
    %v115 = vpop.f32.mrf.mxu0
    %v116 = vadd.f32 0.0, %v115
    %117 = vdwg.mxu0
    %s118 = scalar_lea.vmem %s0, 8
    %v119 = vld [vmem:[%s118] sm:$0xf]
    %v121 = vsel %vm40, %v119, 0
    %123 = vmatpush.bf16.msra.mxu0 0
    %124 = vmatpush.bf16.msra.mxu0 0
    %125 = vmatpush.bf16.msra.mxu0 0
    %126 = vmatpush.bf16.msra.mxu0 0
    %127 = vmatpush.bf16.msra.mxu0 0
    %128 = vmatpush.bf16.msra.mxu0 0
    %129 = vmatpush.bf16.msra.mxu0 %v37
    %130 = vmatpush.bf16.msra.mxu0 %v36
    %131 = vmatmul.bf16.gmra.mxu0 %v121
    %v132 = vpop.f32.mrf.mxu0
    %v133 = vadd.f32 %v26, %v132
    %v134 = vpop.f32.mrf.mxu0
    %135 = vdwg.mxu0
    %v136 = vtanh.pop %v133
    %137 = vmatpush.xpose.msra.mxu0 0.0
    %138 = vmatpush.xpose.msra.mxu0 0.0
    %139 = vmatpush.xpose.msra.mxu0 0.0
    %140 = vmatpush.xpose.msra.mxu0 0.0
    %141 = vmatpush.xpose.msra.mxu0 0.0
    %142 = vmatpush.xpose.msra.mxu0 0.0
    %143 = vmatpush.xpose.msra.mxu0 0.0
    %144 = vmatpush.xpose.msra.mxu0 0.0
    %145 = vmatpush.xpose.msra.mxu0 0.0
    %146 = vmatpush.xpose.msra.mxu0 0.0
    %147 = vmatpush.xpose.msra.mxu0 0.0
    %148 = vmatpush.xpose.msra.mxu0 0.0
    %149 = vmatpush.xpose.msra.mxu0 0.0
    %150 = vmatpush.xpose.msra.mxu0 0.0
    %151 = vmatpush.xpose.msra.mxu0 0.0
    %152 = vmatpush.xpose.msra.mxu0 %v136
    %153 = vmatmul.f32.gmra.mxu0 %v58
    %v154 = vpop.f32.mrf.mxu0
    %v155 = vadd.f32 0.0, %v154
    %156 = vdwg.mxu0
    %s157 = scalar_lea.vmem %s0, 12
    %v158 = vld [vmem:[%s157] sm:$0xf]
    %v160 = vsel %vm40, %v158, 0
    %162 = vmatpush.bf16.msra.mxu0 0
    %163 = vmatpush.bf16.msra.mxu0 0
    %164 = vmatpush.bf16.msra.mxu0 0
    %165 = vmatpush.bf16.msra.mxu0 0
    %166 = vmatpush.bf16.msra.mxu0 0
    %167 = vmatpush.bf16.msra.mxu0 0
    %168 = vmatpush.bf16.msra.mxu0 %v37
    %169 = vmatpush.bf16.msra.mxu0 %v36
    %170 = vmatmul.bf16.gmra.mxu0 %v160
    %v171 = vpop.f32.mrf.mxu0
    %v172 = vadd.f32 %v26, %v171
    %v173 = vpop.f32.mrf.mxu0
    %174 = vdwg.mxu0
    %v175 = vtanh.pop %v172
    %176 = vmatpush.xpose.msra.mxu0 0.0
    %177 = vmatpush.xpose.msra.mxu0 0.0
    %178 = vmatpush.xpose.msra.mxu0 0.0
    %179 = vmatpush.xpose.msra.mxu0 0.0
    %180 = vmatpush.xpose.msra.mxu0 0.0
    %181 = vmatpush.xpose.msra.mxu0 0.0
    %182 = vmatpush.xpose.msra.mxu0 0.0
    %183 = vmatpush.xpose.msra.mxu0 0.0
    %184 = vmatpush.xpose.msra.mxu0 0.0
    %185 = vmatpush.xpose.msra.mxu0 0.0
    %186 = vmatpush.xpose.msra.mxu0 0.0
    %187 = vmatpush.xpose.msra.mxu0 0.0
    %188 = vmatpush.xpose.msra.mxu0 0.0
    %189 = vmatpush.xpose.msra.mxu0 0.0
    %190 = vmatpush.xpose.msra.mxu0 0.0
    %191 = vmatpush.xpose.msra.mxu0 %v175
    %192 = vmatmul.f32.gmra.mxu0 %v58
    %v193 = vpop.f32.mrf.mxu0
    %v194 = vadd.f32 0.0, %v193
    %195 = vdwg.mxu0
    %v197 = vrot.slane %v116, 7
    %v200 = vrot.slane %v155, 6
    %v203 = vrot.slane %v194, 5
    %vm205 = vcmask 1040384
    %v206 = vsel %vm205, %v77, %v197
    %vm207 = vcmask 1041408
    %v208 = vsel %vm207, %v206, %v200
    %vm209 = vcmask 1042432
    %v210 = vsel %vm209, %v208, %v203
    %vm211 = vcmask 60416
    %v212 = vsel %vm211, %v210, -inf
    %213 = vmax.xlane.f32.xlu0 %v212
    %v214 = vpop.xlane.xlu0 %213
    %v215 = vsub.f32 %v210, %v214
    %v216 = vmul.f32 %v215, 1.442695
    %v217 = vpow.pop %v216
    %v218 = vsel %vm211, %v217, 0.0
    %219 = vadd.xlane.f32.xlu0 %v218
    %v220 = vpop.xlane.xlu0 %219
    %v221 = vrcp.pop %v220
    %v222 = vmul.f32 %v217, %v221
    %223 = vst.msk [vmem:[#allocation2] sm:$0xf] %vm211, %v222
    // Predicated region
    $region18: #{task_specific_attention.1} parent=1 // pred_check
      _
    $region19: #{task_specific_attention.1} parent=1 // pred_check_branch
      %225 = sbr.rel (0) target = $region21
    $region20: #{task_specific_attention.1} parent=1 // pred_region
      %227 = vsyncadd [#allocation3], 0
      %s229 = sshll.u32 [#allocation2], 4
      %s230 = int_to_ptr.vmem [resolvable:$true] %s229
      %s231 = sshll.u32 %s4, 4
      %s232 = int_to_ptr.hbm [resolvable:$true] %s231
      %234 = dma.vmem_to_hbm [thread:$0]  %s230, 64, %s232, [#allocation3]
    $region21: #{task_specific_attention.1} parent=1 // pred_fallthru
      _
    // Predicated region
    $region22: #{task_specific_attention.1} parent=1 // pred_check
      _
    $region23: #{task_specific_attention.1} parent=1 // pred_check_branch
      %236 = sbr.rel (0) target = $region25
    $region24: #{task_specific_attention.1} parent=1 // pred_region
      %238 = dma.done [#allocation3], 64
    $region25: #{task_specific_attention.1} parent=1 // pred_fallthru
      _
    %239 = vsyncpa [#allocation3], 1

</llo_original>
